<compile_context>
chip_gen: v7x
topology: tpu7x:2x2x1
jax: 0.10.0
libtpu: 0.0.40
codegen_flags: <defaults>
</compile_context>

<pallas_src>
import functools

import jax
import jax.numpy as jnp
from jax.experimental import pallas as pl
from jax.experimental.pallas import tpu as pltpu

_VMEM_BUDGET_BYTES = 44 * 1024 * 1024   # working-set budget; fits v7x 64 MiB physical
_VMEM_LIMIT_BYTES = 48 * 1024 * 1024    # explicit scoped limit (v5e default ~16 MiB)


def _round_up(n, m):
    return ((n + m - 1) // m) * m


def _cdiv(a, b):
    return (a + b - 1) // b


def _positive_activate_f32(mode, w):
    """Weight activation in f32 (v5e VPU/EUP have no bf16 path)."""
    if mode == "sigmoid":
        return 1.0 / (1.0 + jnp.exp(-w))
    if mode == "softplus":
        # numerically-stable softplus: max(w,0) + log1p(exp(-|w|))
        return jnp.maximum(w, 0.0) + jnp.log1p(jnp.exp(-jnp.abs(w)))
    if mode == "relu":
        return jnp.maximum(w, 0.0)
    if mode == "softmax":
        # softmax over dim 0 (d_in axis), matching torch .softmax(0); it is
        # column-wise independent, so per-(d_in, tn) tiles are exact.
        m = jnp.max(w, axis=0, keepdims=True)
        e = jnp.exp(w - m)
        return e / jnp.sum(e, axis=0, keepdims=True)
    if mode == "none":
        return w
    raise ValueError(f"unknown mode: {mode}")


def _activate_weight_kernel(w_ref, o_ref, *, mode):
    # w_ref: (d_in, tn1) f32 tile; o_ref: (d_in, tn1) bf16 tile.
    w = w_ref[...].astype(jnp.float32)
    o_ref[...] = _positive_activate_f32(mode, w).astype(o_ref.dtype)


def _matmul_kernel(x_ref, w_ref, o_ref, acc_ref):
    # x_ref: (tm, tk) bf16 (pre-cast in wrapper), w_ref: (tk, tn) bf16
    # (already activated), o_ref: (tm, tn) f32, acc_ref: (tm, tn) f32 scratch.
    k = pl.program_id(2)

    @pl.when(k == 0)
    def _():
        acc_ref[...] = jnp.zeros_like(acc_ref)

    acc_ref[...] += jnp.dot(x_ref[...], w_ref[...],
                            preferred_element_type=jnp.float32)

    @pl.when(k == pl.num_programs(2) - 1)
    def _():
        o_ref[...] = acc_ref[...].astype(o_ref.dtype)


def _choose_tiles(M, d_in, d_out, tm_max, tn_pref, tk_max):
    # Lane-dense N tile: prefer 256 (fills v6e/v7x 2x256 MXU), multiple of 128.
    d_out_p = _round_up(d_out, 128)
    tn = _round_up(min(tn_pref, d_out_p), 128)
    if d_out_p % tn != 0:
        tn = 128  # d_out_p is always a 128-multiple, so this always divides.

    # K tile: full d_in when small, else balanced 128-multiple tiles.
    if d_in <= tk_max:
        tk, d_in_p = d_in, d_in
    else:
        nk = _cdiv(d_in, tk_max)
        tk = _round_up(_cdiv(d_in, nk), 128)
        d_in_p = _cdiv(d_in, tk) * tk

    # M tile: balanced against M so zero-padding waste stays small.
    nm = _cdiv(max(M, 1), tm_max)
    tm = _round_up(_cdiv(max(M, 1), nm), 8)

    # VMEM-aware clamp: 2x double-buffered (bf16 x, bf16 w, f32 out) + f32 acc.
    def footprint(tm_):
        return 2 * (tm_ * tk * 2 + tk * tn * 2 + tm_ * tn * 4) + tm_ * tn * 4

    while footprint(tm) > _VMEM_BUDGET_BYTES and tm > 8:
        tm = max(8, _round_up(tm // 2, 8))

    M_p = _round_up(M, tm)
    return tm, tn, tk, M_p, d_in_p, d_out_p


def positive_linear(x, weight, mode, *, tm_max=1024, tn=256, tk_max=2048):
    """x: (..., d_in), weight: (d_in, d_out) -> (..., d_out) in x.dtype."""
    d_in, d_out = weight.shape
    lead = x.shape[:-1]
    out_dtype = x.dtype

    x2 = x.reshape(-1, d_in)
    if x2.dtype != jnp.bfloat16:
        # Cast once at the boundary: halves x HBM read + VMEM and removes the
        # per-tile VPU cast inside the kernel.  MXU consumes bf16 either way.
        x2 = x2.astype(jnp.bfloat16)
    M = x2.shape[0]

    if M == 0:  # empty leading batch: avoid a zero-size grid dimension.
        return jnp.zeros(lead + (d_out,), dtype=out_dtype)

    tm, tn_, tk, M_p, d_in_p, d_out_p = _choose_tiles(
        M, d_in, d_out, tm_max, tn, tk_max)
    ni, nj, nk = M_p // tm, d_out_p // tn_, d_in_p // tk

    # ---- Stage 1: activate the weight once (f32 math, bf16 result). --------
    w_f32 = weight.astype(jnp.float32)
    if d_out_p != d_out:
        w_f32 = jnp.pad(w_f32, ((0, 0), (0, d_out_p - d_out)))

    tn1 = tn_
    while d_in * tn1 * 12 > _VMEM_BUDGET_BYTES and tn1 > 128:
        tn1 //= 2  # keeps dividing d_out_p (tn_ is 128 or 256)
    nj1 = d_out_p // tn1

    w_act = pl.pallas_call(
        functools.partial(_activate_weight_kernel, mode=mode),
        out_shape=jax.ShapeDtypeStruct((d_in, d_out_p), jnp.bfloat16),
        grid_spec=pltpu.PrefetchScalarGridSpec(
            num_scalar_prefetch=0,
            grid=(nj1,),
            in_specs=[pl.BlockSpec((d_in, tn1), lambda j: (0, j))],
            out_specs=pl.BlockSpec((d_in, tn1), lambda j: (0, j)),
        ),
        compiler_params=pltpu.CompilerParams(
            dimension_semantics=("parallel",),
            vmem_limit_bytes=_VMEM_LIMIT_BYTES),
    )(w_f32)

    # Pad K AFTER activation (softmax must normalize over the real d_in only);
    # zero rows of w_act x zero cols of x contribute nothing to the matmul.
    if d_in_p != d_in:
        w_act = jnp.pad(w_act, ((0, d_in_p - d_in), (0, 0)))
    if M_p != M or d_in_p != d_in:
        x2 = jnp.pad(x2, ((0, M_p - M), (0, d_in_p - d_in)))

    # ---- Stage 2: (i, j, k) tiled matmul with f32 accumulator scratch. -----
    flops = 2 * M_p * d_in_p * d_out_p
    x_bytes = M_p * d_in_p * 2 * (nj if nk > 1 else 1)
    w_bytes = ni * d_in_p * d_out_p * 2
    o_bytes = M_p * d_out_p * 4
    cost = pl.CostEstimate(flops=flops, transcendentals=0,
                           bytes_accessed=x_bytes + w_bytes + o_bytes)

    out = pl.pallas_call(
        _matmul_kernel,
        out_shape=jax.ShapeDtypeStruct((M_p, d_out_p), jnp.float32),
        grid_spec=pltpu.PrefetchScalarGridSpec(
            num_scalar_prefetch=0,
            grid=(ni, nj, nk),
            in_specs=[
                pl.BlockSpec((tm, tk), lambda i, j, k: (i, k)),    # x row/K tile
                pl.BlockSpec((tk, tn_), lambda i, j, k: (k, j)),   # activated weight
            ],
            out_specs=pl.BlockSpec((tm, tn_), lambda i, j, k: (i, j)),
            scratch_shapes=[pltpu.VMEM((tm, tn_), jnp.float32)],
        ),
        compiler_params=pltpu.CompilerParams(
            dimension_semantics=("parallel", "parallel", "arbitrary"),
            vmem_limit_bytes=_VMEM_LIMIT_BYTES),
        cost_estimate=cost,
    )(x2, w_act)

    out = out[:M, :d_out]
    return out.reshape(*lead, d_out).astype(out_dtype)


def _reference(x, weight, mode):
    if mode == "sigmoid":
        w = jax.nn.sigmoid(weight)
    elif mode == "softplus":
        w = jax.nn.softplus(weight)
    elif mode == "relu":
        w = jax.nn.relu(weight)
    elif mode == "softmax":
        w = jax.nn.softmax(weight, axis=0)
    else:
        w = weight
    return jnp.matmul(x, w)


if __name__ == "__main__":
    key = jax.random.PRNGKey(0)
    k_x, k_w = jax.random.split(key)

    batch, seq, d_in, d_out = 2, 8, 32, 64
    # deterministic synthetic parameter (stands in for torch.randn(d_in, d_out))
    weight = jax.random.normal(k_w, (d_in, d_out), dtype=jnp.float32)
    x = jax.random.normal(k_x, (batch, seq, d_in), dtype=jnp.float32)

    ok = True
    for mode in ("sigmoid", "softplus", "relu", "softmax", "none"):
        out = positive_linear(x, weight, mode)
        out = jax.block_until_ready(out)
        ref = _reference(x, weight, mode)
        # bf16 MXU inputs with f32 accumulation -> compare loosely vs f32 ref.
        if not jnp.allclose(out, ref, atol=1e-1, rtol=5e-2):
            ok = False
            err = float(jnp.max(jnp.abs(out - ref)))
            print(f"mismatch for mode={mode}, max_abs_err={err}")

    if ok:
        print("KERNEL_OK")
</pallas_src>

<mosaic_0001>
module attributes {stable_mosaic.version = 11 : i64} {
  func.func @_activate_weight_kernel(%arg0: i32, %arg1: memref<32x128xf32, #tpu.memory_space<vmem>>, %arg2: memref<32x128xbf16, #tpu.memory_space<vmem>>) attributes {dimension_semantics = [#tpu.dimension_semantics<parallel>], iteration_bounds = array<i64: 1>, scalar_prefetch = 0 : i64, scratch_operands = 0 : i64, tpu.core_type = #tpu.core_type<tc>, window_params = [{transform_indices = @transform_0, window_bounds = array<i64: 32, 128>}, {transform_indices = @transform_1, window_bounds = array<i64: 32, 128>}]} {
    %c0 = arith.constant 0 : index
    %c0_0 = arith.constant 0 : index
    %0 = vector.load %arg1[%c0, %c0_0] : memref<32x128xf32, #tpu.memory_space<vmem>>, vector<32x128xf32>
    %cst = arith.constant 0.000000e+00 : f32
    %1 = vector.broadcast %cst : f32 to vector<32x128xf32>
    %2 = arith.subf %1, %0 : vector<32x128xf32>
    %3 = math.exp %2 : vector<32x128xf32>
    %cst_1 = arith.constant 1.000000e+00 : f32
    %4 = vector.broadcast %cst_1 : f32 to vector<32x128xf32>
    %5 = arith.addf %4, %3 : vector<32x128xf32>
    %cst_2 = arith.constant 1.000000e+00 : f32
    %6 = vector.broadcast %cst_2 : f32 to vector<32x128xf32>
    %7 = arith.divf %6, %5 : vector<32x128xf32>
    %8 = arith.truncf %7 : vector<32x128xf32> to vector<32x128xbf16>
    %c0_3 = arith.constant 0 : index
    %c0_4 = arith.constant 0 : index
    %9 = vector.load %arg2[%c0_3, %c0_4] : memref<32x128xbf16, #tpu.memory_space<vmem>>, vector<32x128xbf16>
    tpu.vector_store %arg2[%c0_3, %c0_4], %8 {strides = array<i32>} : memref<32x128xbf16, #tpu.memory_space<vmem>>, vector<32x128xbf16>,
    return
  }
  func.func @transform_0(%arg0: i32) -> (i32, i32) {
    %c0_i32 = arith.constant 0 : i32
    %c0_i32_0 = arith.constant 0 : i32
    return %c0_i32, %arg0 : i32, i32
  }
  func.func @transform_1(%arg0: i32) -> (i32, i32) {
    %c0_i32 = arith.constant 0 : i32
    %c0_i32_0 = arith.constant 0 : i32
    return %c0_i32, %arg0 : i32, i32
  }
}

</mosaic_0001>

<llo_original>
// kernel: tpu_custom_call.1
$region0: #{tpu_custom_call.1}
  #allocation0 [shape = 'u32[]', space=smem, size = 0x4, offset = 0x4, fixed_abs, tag = 'smem constant byte address 0x4 - core index']
  #allocation1 [shape = 'u32[144,128]{1,0:T(1,128)}', space=vmem, size = 0x12000, scoped, tag = 'internal scratch']
  %s0 = inlined_call_operand.hbm [shape: f32[32,128], index: 0, kind: input, shape index: {}]
  %s1 = inlined_call_operand.hbm [shape: bf16[32,128], index: 1, kind: output, shape index: {}]
  %s2 = sld [smem:[#allocation0]]
  $region18: #{tpu_custom_call.1} parent=0
    _
  %s4 = ssub.s32 1, %s2
  %s5 = scalar_select 0, %s4, %s2
  $region1: #{tpu_custom_call.1} parent=0
    #allocation2 [shape = 'u8[16384]{0}', space=vmem, size = 0x4000, scoped, tag = 'input window, operand 0, single buffered']
    #allocation3 [shape = 's32[1]{0}', space=sflag, size = 0x4, scoped, tag = 'scoped memory for tpu_custom_call.1']
    #allocation4 [shape = 's32[1]{0}', space=sflag, size = 0x4, scoped, tag = 'scoped memory for tpu_custom_call.1']
    #allocation5 [shape = 'u8[8192]{0}', space=vmem, size = 0x2000, scoped, tag = 'output window, operand 0, single buffered']
    %6 = vsyncpa [#allocation3], 0
    %7 = vsyncpa [#allocation4], 0
    // Predicated region
    $region2: #{tpu_custom_call.1} parent=1 // pred_check
      _
    $region3: #{tpu_custom_call.1} parent=1 // pred_check_branch
      %9 = sbr.rel (0) target = $region5
    $region4: #{tpu_custom_call.1} parent=1 // pred_region
      %s11 = ssub.s32 512, 512
      %12 = vsyncadd [#allocation3], %s11
      %s13 = sshll.u32 [#allocation2], 4
      %s14 = int_to_ptr.vmem [resolvable:$true] %s13
      %19 = dma.hbm_to_vmem [thread:$0]  %s0, 512, %s14, [#allocation3], 128, 128, 8
    $region5: #{tpu_custom_call.1} parent=1 // pred_fallthru
      _
    // Predicated region
    $region6: #{tpu_custom_call.1} parent=1 // pred_check
      _
    $region7: #{tpu_custom_call.1} parent=1 // pred_check_branch
      %21 = sbr.rel (0) target = $region9
    $region8: #{tpu_custom_call.1} parent=1 // pred_region
      %22 = dma.done [#allocation3], 512
    $region9: #{tpu_custom_call.1} parent=1 // pred_fallthru
      _
    %v23 = vld [vmem:[#allocation2] sm:$0xff]
    %v24 = vld [vmem:[#allocation2 + $0x8] sm:$0xff]
    %v25 = vld [vmem:[#allocation2 + $0x10] sm:$0xff]
    %v26 = vld [vmem:[#allocation2 + $0x18] sm:$0xff]
    %v27 = vsub.f32 0.0, %v23
    %v28 = vsub.f32 0.0, %v24
    %v29 = vsub.f32 0.0, %v25
    %v30 = vsub.f32 0.0, %v26
    %v31 = vmul.f32 %v27, 1.442695
    %v32 = vpow.pop %v31
    %v33 = vmul.f32 %v28, 1.442695
    %v34 = vpow.pop %v33
    %v35 = vmul.f32 %v29, 1.442695
    %v36 = vpow.pop %v35
    %v37 = vmul.f32 %v30, 1.442695
    %v38 = vpow.pop %v37
    %v39 = vadd.f32 %v32, 1.0
    %v40 = vadd.f32 %v34, 1.0
    %v41 = vadd.f32 %v36, 1.0
    %v42 = vadd.f32 %v38, 1.0
    %v43 = vrcp.pop %v39
    %v44 = vmul.f32 1.0, %v43
    %v45 = vrcp.pop %v40
    %v46 = vmul.f32 1.0, %v45
    %v47 = vrcp.pop %v41
    %v48 = vmul.f32 1.0, %v47
    %v49 = vrcp.pop %v42
    %v50 = vmul.f32 1.0, %v49
    %v51 = vpack.c.bf16 %v46, %v44
    %v52 = vpack.c.bf16 %v50, %v48
    %v55 = vunpack.c.l.b16 %v51
    %v56 = vunpack.c.h.b16 %v51
    %v57 = vunpack.c.l.b16 %v52
    %v58 = vunpack.c.h.b16 %v52
    %v59 = vpack.c.b16 %v55, %v55
    %v60 = vpack.c.b16 %v56, %v56
    %v61 = vpack.c.b16 %v57, %v57
    %v62 = vpack.c.b16 %v58, %v58
    %67 = vst [vmem:[#allocation5] sm:$0xf] %v59
    %68 = vst [vmem:[#allocation5 + $0x4] sm:$0xf] %v60
    %69 = vst [vmem:[#allocation5 + $0x8] sm:$0xf] %v61
    %70 = vst [vmem:[#allocation5 + $0xc] sm:$0xf] %v62
    // Predicated region
    $region10: #{tpu_custom_call.1} parent=1 // pred_check
      _
    $region11: #{tpu_custom_call.1} parent=1 // pred_check_branch
      %72 = sbr.rel (0) target = $region13
    $region12: #{tpu_custom_call.1} parent=1 // pred_region
      %s74 = ssub.s32 256, 256
      %75 = vsyncadd [#allocation4], %s74
      %s76 = sshll.u32 [#allocation5], 4
      %s77 = int_to_ptr.vmem [resolvable:$true] %s76
      %82 = dma.vmem_to_hbm [thread:$0]  %s77, 256, %s1, [#allocation4], 64, 64, 4
    $region13: #{tpu_custom_call.1} parent=1 // pred_fallthru
      _
    // Predicated region
    $region14: #{tpu_custom_call.1} parent=1 // pred_check
      _
    $region15: #{tpu_custom_call.1} parent=1 // pred_check_branch
      %84 = sbr.rel (0) target = $region17
    $region16: #{tpu_custom_call.1} parent=1 // pred_region
      %85 = dma.done [#allocation4], 256
    $region17: #{tpu_custom_call.1} parent=1 // pred_fallthru
      _
    %86 = vsyncpa [#allocation3], 1
    %87 = vsyncpa [#allocation4], 1

</llo_original>
